<compile_context>
chip_gen: v6e
topology: v6e:2x2x1
jax: 0.10.0
libtpu: 0.0.40
codegen_flags: <defaults>
</compile_context>

<pallas_src>
import functools

import jax
import jax.numpy as jnp
from jax.experimental import pallas as pl
from jax.experimental.pallas import tpu as pltpu


def _round_up(x: int, m: int) -> int:
    return (x + m - 1) // m * m


def _pick_tile(padded_dim: int, unit: int, cap: int) -> int:
    """Largest multiple of `unit` that divides `padded_dim` and is <= cap."""
    q = padded_dim // unit
    for d in range(max(1, min(cap // unit, q)), 0, -1):
        if q % d == 0:
            return unit * d
    return unit


def qlinear_kernel(x_ref, w_ref, b_ref, o_ref):
    """One (i, j, k) grid step of out = x @ W.T + b.

    x_ref : (tm, tk)  activation tile (f32 in HBM/VMEM, cast to bf16 here)
    w_ref : (tk, tn)  weight tile, pre-transposed (K, N) layout, bf16
    b_ref : (1, tn)   bias tile (f32)
    o_ref : (tm, tn)  f32 output tile, resident across the K axis (accumulator)
    """
    @pl.when(pl.program_id(2) == 0)
    def _():
        # Initialize the resident output tile with the bias exactly once.
        o_ref[...] = jnp.broadcast_to(b_ref[...], o_ref.shape)

    o_ref[...] += jnp.dot(
        x_ref[...].astype(jnp.bfloat16),
        w_ref[...],
        preferred_element_type=jnp.float32,
    )


def prepare_qlinear_params(w, b):
    """One-time (load-time) parameter prep.

    w : (N, K) f32, PyTorch nn.Linear layout
    b : (N,) f32 or None
    Returns (w_p: (Kp, Np) bf16, b_p: (1, Np) f32) with Kp, Np multiples of 128.
    Zero padding is exact for the matmul (padded rows/cols contribute 0).
    """
    N, K = w.shape
    Kp = _round_up(K, 128)
    Np = _round_up(N, 128)
    w_p = jnp.pad(jnp.asarray(w, jnp.float32).T, ((0, Kp - K), (0, Np - N)))
    w_p = w_p.astype(jnp.bfloat16)
    if b is None:
        b = jnp.zeros((N,), jnp.float32)
    b_p = jnp.pad(jnp.asarray(b, jnp.float32), (0, Np - N)).reshape(1, Np)
    return w_p, b_p


@functools.partial(jax.jit, static_argnames=("out_features",))
def qlinear_forward(x, w_p, b_p, *, out_features):
    """x: (..., K) f32, w_p/b_p from prepare_qlinear_params -> (..., out_features) f32."""
    *lead, K = x.shape
    M = 1
    for d in lead:
        M *= d
    x2 = jnp.asarray(x, jnp.float32).reshape(M, K)

    Kp, Np = w_p.shape
    assert Kp >= K, "prepared weight K-dim smaller than activation K"
    assert Np >= out_features, "prepared weight N-dim smaller than out_features"

    # Pad M to a multiple of 16 (bf16 sublane packing after the in-kernel cast).
    Mp = _round_up(max(M, 1), 16)

    # Tile selection: biggest tiles (<= caps) that exactly divide the padded dims.
    tm = _pick_tile(Mp, 16, 512)
    tn_cap = 512
    if Mp // tm == 1 and Np // 128 >= 2:
        # Single M block: keep >= 2 blocks on the parallel N axis (v7x has 2 TCs).
        tn_cap = min(tn_cap, (Np // 256) * 128)
    tn = _pick_tile(Np, 128, max(tn_cap, 128))
    tk = Kp if Kp <= 2048 else _pick_tile(Kp, 128, 1024)

    # Activation padding only (f32; weight/bias already prepared at load time).
    x_p = jnp.pad(x2, ((0, Mp - M), (0, Kp - K)))

    grid = (Mp // tm, Np // tn, Kp // tk)

    # Double-buffered working set (x f32, w bf16, bias f32, resident f32 output).
    work_bytes = (
        2 * tm * tk * 4
        + 2 * tk * tn * 2
        + 2 * tn * 4
        + 2 * tm * tn * 4
    )
    vmem_limit = min(max(32 * 1024 * 1024, 2 * work_bytes), 48 * 1024 * 1024)

    flops = 2 * Mp * Np * Kp
    bytes_accessed = Mp * Kp * 4 + Kp * Np * 2 + Np * 4 + Mp * Np * 4

    out_padded = pl.pallas_call(
        qlinear_kernel,
        out_shape=jax.ShapeDtypeStruct((Mp, Np), jnp.float32),
        grid_spec=pltpu.PrefetchScalarGridSpec(
            num_scalar_prefetch=0,
            grid=grid,
            in_specs=[
                pl.BlockSpec((tm, tk), lambda i, j, k: (i, k)),  # x (f32)
                pl.BlockSpec((tk, tn), lambda i, j, k: (k, j)),  # w (K, N) bf16
                pl.BlockSpec((1, tn), lambda i, j, k: (0, j)),   # bias (f32)
            ],
            out_specs=pl.BlockSpec((tm, tn), lambda i, j, k: (i, j)),
        ),
        compiler_params=pltpu.CompilerParams(
            dimension_semantics=("parallel", "parallel", "arbitrary"),
            vmem_limit_bytes=vmem_limit,
        ),
        cost_estimate=pl.CostEstimate(
            flops=flops, transcendentals=0, bytes_accessed=bytes_accessed
        ),
    )(x_p, w_p, b_p)

    out = out_padded[:M, :out_features]
    return out.reshape(*lead, out_features)


if __name__ == "__main__":
    key = jax.random.PRNGKey(0)
    kx, kw, kb = jax.random.split(key, 3)

    # Small shapes consistent with nn.Linear(in_features=32, out_features=16)
    # applied to a (batch, seq, in_features) activation.
    batch, seq, in_features, out_features = 2, 8, 32, 16

    x = jax.random.normal(kx, (batch, seq, in_features), dtype=jnp.float32)
    # Deterministic synthetic parameters (module __init__ wraps an nn.Linear).
    w = 0.1 * jax.random.normal(kw, (out_features, in_features), dtype=jnp.float32)
    b = 0.1 * jax.random.normal(kb, (out_features,), dtype=jnp.float32)

    # One-time, load-time parameter preparation (not on the per-call path).
    w_p, b_p = prepare_qlinear_params(w, b)

    out = qlinear_forward(x, w_p, b_p, out_features=out_features)
    out = jax.block_until_ready(out)
    assert out.shape == (batch, seq, out_features)

    # Strict check vs. the same math on bf16-rounded inputs (f32 accumulation).
    x_bf = x.astype(jnp.bfloat16).astype(jnp.float32)
    w_bf = w.astype(jnp.bfloat16).astype(jnp.float32)
    ref_bf = jnp.einsum("bsk,nk->bsn", x_bf, w_bf,
                        preferred_element_type=jnp.float32) + b
    assert jnp.allclose(out, ref_bf, atol=2e-3, rtol=2e-3), \
        "kernel mismatch vs bf16 reference"

    # Loose check vs. the full-f32 module semantics (bf16 multiply rounding only).
    ref_f32 = jnp.einsum("bsk,nk->bsn", x, w) + b
    assert jnp.allclose(out, ref_f32, atol=5e-2, rtol=5e-2), \
        "kernel drifted from f32 reference"

    print("KERNEL_OK")
</pallas_src>

<mosaic_0001>
module attributes {stable_mosaic.version = 11 : i64} {
  func.func @qlinear_kernel(%arg0: i32, %arg1: i32, %arg2: i32, %arg3: memref<16x128xf32, #tpu.memory_space<vmem>>, %arg4: memref<128x128xbf16, #tpu.memory_space<vmem>>, %arg5: memref<1x128xf32, #tpu.memory_space<vmem>>, %arg6: memref<16x128xf32, #tpu.memory_space<vmem>>) attributes {dimension_semantics = [#tpu.dimension_semantics<parallel>, #tpu.dimension_semantics<parallel>, #tpu.dimension_semantics<arbitrary>], iteration_bounds = array<i64: 1, 1, 1>, scalar_prefetch = 0 : i64, scratch_operands = 0 : i64, tpu.core_type = #tpu.core_type<tc>, window_params = [{transform_indices = @transform_0, window_bounds = array<i64: 16, 128>}, {transform_indices = @transform_1, window_bounds = array<i64: 128, 128>}, {transform_indices = @transform_2, window_bounds = array<i64: 1, 128>}, {transform_indices = @transform_3, window_bounds = array<i64: 16, 128>}]} {
    %c0_i32 = arith.constant 0 : i32
    %0 = arith.cmpi eq, %arg2, %c0_i32 : i32
    %1 = arith.extui %0 : i1 to i32
    %c0_i32_0 = arith.constant 0 : i32
    %2 = arith.cmpi ne, %1, %c0_i32_0 : i32
    scf.if %2 {
      %c0_8 = arith.constant 0 : index
      %c0_9 = arith.constant 0 : index
      %10 = vector.load %arg5[%c0_8, %c0_9] : memref<1x128xf32, #tpu.memory_space<vmem>>, vector<1x128xf32>
      %11 = vector.shape_cast %10 : vector<1x128xf32> to vector<1x128xf32>
      %12 = vector.broadcast %11 : vector<1x128xf32> to vector<16x128xf32>
      %c0_10 = arith.constant 0 : index
      %c0_11 = arith.constant 0 : index
      %13 = vector.load %arg6[%c0_10, %c0_11] : memref<16x128xf32, #tpu.memory_space<vmem>>, vector<16x128xf32>
      tpu.vector_store %arg6[%c0_10, %c0_11], %12 {strides = array<i32>} : memref<16x128xf32, #tpu.memory_space<vmem>>, vector<16x128xf32>,
    } else {
    }
    %c0 = arith.constant 0 : index
    %c0_1 = arith.constant 0 : index
    %3 = vector.load %arg6[%c0, %c0_1] : memref<16x128xf32, #tpu.memory_space<vmem>>, vector<16x128xf32>
    %c0_2 = arith.constant 0 : index
    %c0_3 = arith.constant 0 : index
    %4 = vector.load %arg3[%c0_2, %c0_3] : memref<16x128xf32, #tpu.memory_space<vmem>>, vector<16x128xf32>
    %5 = arith.truncf %4 : vector<16x128xf32> to vector<16x128xbf16>
    %c0_4 = arith.constant 0 : index
    %c0_5 = arith.constant 0 : index
    %6 = vector.load %arg4[%c0_4, %c0_5] : memref<128x128xbf16, #tpu.memory_space<vmem>>, vector<128x128xbf16>
    %cst = arith.constant dense<0.000000e+00> : vector<16x128xf32>
    %7 = tpu.matmul %5, %6, %cst {dimension_numbers = #tpu.dot_dimension_numbers<[1], [0], [0], [1], [0, 0, 1, 1], [], []>} : vector<16x128xbf16>, vector<128x128xbf16>, vector<16x128xf32> -> vector<16x128xf32>
    %8 = arith.addf %3, %7 : vector<16x128xf32>
    %c0_6 = arith.constant 0 : index
    %c0_7 = arith.constant 0 : index
    %9 = vector.load %arg6[%c0_6, %c0_7] : memref<16x128xf32, #tpu.memory_space<vmem>>, vector<16x128xf32>
    tpu.vector_store %arg6[%c0_6, %c0_7], %8 {strides = array<i32>} : memref<16x128xf32, #tpu.memory_space<vmem>>, vector<16x128xf32>,
    return
  }
  func.func @transform_0(%arg0: i32, %arg1: i32, %arg2: i32) -> (i32, i32) {
    %c0_i32 = arith.constant 0 : i32
    return %arg0, %arg2 : i32, i32
  }
  func.func @transform_1(%arg0: i32, %arg1: i32, %arg2: i32) -> (i32, i32) {
    %c0_i32 = arith.constant 0 : i32
    return %arg2, %arg1 : i32, i32
  }
  func.func @transform_2(%arg0: i32, %arg1: i32, %arg2: i32) -> (i32, i32) {
    %c0_i32 = arith.constant 0 : i32
    %c0_i32_0 = arith.constant 0 : i32
    return %c0_i32, %arg1 : i32, i32
  }
  func.func @transform_3(%arg0: i32, %arg1: i32, %arg2: i32) -> (i32, i32) {
    %c0_i32 = arith.constant 0 : i32
    return %arg0, %arg1 : i32, i32
  }
}

</mosaic_0001>

<llo_original>
// kernel: qlinear_forward.1
$region0: #{qlinear_forward.1}
  #allocation0 [shape = 'u32[]', space=smem, size = 0x4, offset = 0x4, fixed_abs, tag = 'smem constant byte address 0x4 - core index']
  #allocation1 [shape = 'u32[144,128]{1,0:T(1,128)}', space=vmem, size = 0x12000, scoped, tag = 'internal scratch']
  %s0 = inlined_call_operand.vmem [shape: f32[16,128], index: 0, kind: input, shape index: {}]
  %s1 = inlined_call_operand.hbm [shape: bf16[128,128], index: 1, kind: input, shape index: {}]
  %s2 = inlined_call_operand.vmem [shape: f32[1,128], index: 2, kind: input, shape index: {}]
  %s3 = inlined_call_operand.vmem [shape: f32[16,128], index: 3, kind: output, shape index: {}]
  %s4 = sld [smem:[#allocation0]]
  $region30: #{qlinear_forward.1} parent=0
    _
  %s6 = ssub.s32 1, %s4
  %s7 = scalar_select 0, %s6, %s4
  $region1: #{qlinear_forward.1} parent=0
    #allocation2 [shape = 'u8[32768]{0}', space=vmem, size = 0x8000, scoped, tag = 'input window, operand 1, single buffered']
    #allocation3 [shape = 's32[1]{0}', space=sflag, size = 0x4, scoped, tag = 'scoped memory for qlinear_forward.1']
    %8 = vsyncpa [#allocation3], 0
    // Predicated region
    $region2: #{qlinear_forward.1} parent=1 // pred_check
      _
    $region3: #{qlinear_forward.1} parent=1 // pred_check_branch
      %10 = sbr.rel (0) target = $region5
    $region4: #{qlinear_forward.1} parent=1 // pred_region
      _
    $region5: #{qlinear_forward.1} parent=1 // pred_fallthru
      _
    // Predicated region
    $region6: #{qlinear_forward.1} parent=1 // pred_check
      _
    $region7: #{qlinear_forward.1} parent=1 // pred_check_branch
      %12 = sbr.rel (0) target = $region9
    $region8: #{qlinear_forward.1} parent=1 // pred_region
      %s14 = ssub.s32 1024, 1024
      %15 = vsyncadd [#allocation3], %s14
      %s16 = sshll.u32 [#allocation2], 4
      %s17 = int_to_ptr.vmem [resolvable:$true] %s16
      %22 = dma.hbm_to_vmem [thread:$0]  %s1, 1024, %s17, [#allocation3], 64, 64, 4
    $region9: #{qlinear_forward.1} parent=1 // pred_fallthru
      _
    // Predicated region
    $region10: #{qlinear_forward.1} parent=1 // pred_check
      _
    $region11: #{qlinear_forward.1} parent=1 // pred_check_branch
      %24 = sbr.rel (0) target = $region13
    $region12: #{qlinear_forward.1} parent=1 // pred_region
      _
    $region13: #{qlinear_forward.1} parent=1 // pred_fallthru
      _
    // Predicated region
    $region14: #{qlinear_forward.1} parent=1 // pred_check
      _
    $region15: #{qlinear_forward.1} parent=1 // pred_check_branch
      %26 = sbr.rel (0) target = $region17
    $region16: #{qlinear_forward.1} parent=1 // pred_region
      %27 = dma.done [#allocation3], 1024
    $region17: #{qlinear_forward.1} parent=1 // pred_fallthru
      _
    %p29 = scmp.eq.s32.totalorder 0, 0
    // Predicated region
    $region18: #{qlinear_forward.1} parent=1 // pred_check
      %p30 = pneg %p29
    $region19: #{qlinear_forward.1} parent=1 // pred_check_branch
      %32 = sbr.rel (%p30) target = $region21
    $region20: #{qlinear_forward.1} parent=1 // pred_region
      %v33 = vld [vmem:[%s2] sm:$0x1]
      %v35 = vlaneseq
      %v36 = vshrl.u32 %v35, 7
      %v37 = vsub.s32 0, %v36
      %v38 = vrot.slane %v33, %v37
      %40 = vst [vmem:[%s3] sm:$0xff] %v38
      %41 = vst [vmem:[%s3 + $0x8] sm:$0xff] %v38
    $region21: #{qlinear_forward.1} parent=1 // pred_fallthru
      _
    %v42 = vld [vmem:[%s3] sm:$0xff]
    %v43 = vld [vmem:[%s3 + $0x8] sm:$0xff]
    %v44 = vld [vmem:[%s0] sm:$0xff]
    %v45 = vld [vmem:[%s0 + $0x8] sm:$0xff]
    %v46 = vpack.c.bf16 %v45, %v44
    %v47 = vld [vmem:[#allocation2] sm:$0xf]
    %v48 = vld [vmem:[#allocation2 + $0x4] sm:$0xf]
    %v49 = vld [vmem:[#allocation2 + $0x8] sm:$0xf]
    %v50 = vld [vmem:[#allocation2 + $0xc] sm:$0xf]
    %v51 = vld [vmem:[#allocation2 + $0x10] sm:$0xf]
    %v52 = vld [vmem:[#allocation2 + $0x14] sm:$0xf]
    %v53 = vld [vmem:[#allocation2 + $0x18] sm:$0xf]
    %v54 = vld [vmem:[#allocation2 + $0x1c] sm:$0xf]
    %v55 = vld [vmem:[#allocation2 + $0x20] sm:$0xf]
    %v56 = vld [vmem:[#allocation2 + $0x24] sm:$0xf]
    %v57 = vld [vmem:[#allocation2 + $0x28] sm:$0xf]
    %v58 = vld [vmem:[#allocation2 + $0x2c] sm:$0xf]
    %v59 = vld [vmem:[#allocation2 + $0x30] sm:$0xf]
    %v60 = vld [vmem:[#allocation2 + $0x34] sm:$0xf]
    %v61 = vld [vmem:[#allocation2 + $0x38] sm:$0xf]
    %v62 = vld [vmem:[#allocation2 + $0x3c] sm:$0xf]
    %v79 = vunpack.c.l.b16 %v47
    %v80 = vunpack.c.l.b16 %v48
    %v81 = vunpack.c.l.b16 %v49
    %v82 = vunpack.c.l.b16 %v50
    %v83 = vunpack.c.l.b16 %v51
    %v84 = vunpack.c.l.b16 %v52
    %v85 = vunpack.c.l.b16 %v53
    %v86 = vunpack.c.l.b16 %v54
    %v87 = vunpack.c.l.b16 %v55
    %v88 = vunpack.c.l.b16 %v56
    %v89 = vunpack.c.l.b16 %v57
    %v90 = vunpack.c.l.b16 %v58
    %v91 = vunpack.c.l.b16 %v59
    %v92 = vunpack.c.l.b16 %v60
    %v93 = vunpack.c.l.b16 %v61
    %v94 = vunpack.c.l.b16 %v62
    %v95 = vpack.c.b16 %v80, %v79
    %v96 = vpack.c.b16 %v82, %v81
    %v97 = vpack.c.b16 %v84, %v83
    %v98 = vpack.c.b16 %v86, %v85
    %v99 = vpack.c.b16 %v88, %v87
    %v100 = vpack.c.b16 %v90, %v89
    %v101 = vpack.c.b16 %v92, %v91
    %v102 = vpack.c.b16 %v94, %v93
    %111 = vmatprep.subr.bf16.mxu0 0
    %112 = vmatpush1.bf16.msra.mxu0 %v102
    %113 = vmatprep.subr.bf16.mxu0 0
    %114 = vmatpush1.bf16.msra.mxu0 %v101
    %115 = vmatprep.subr.bf16.mxu0 0
    %116 = vmatpush1.bf16.msra.mxu0 %v100
    %117 = vmatprep.subr.bf16.mxu0 0
    %118 = vmatpush1.bf16.msra.mxu0 %v99
    %119 = vmatprep.subr.bf16.mxu0 0
    %120 = vmatpush1.bf16.msra.mxu0 %v98
    %121 = vmatprep.subr.bf16.mxu0 0
    %122 = vmatpush1.bf16.msra.mxu0 %v97
    %123 = vmatprep.subr.bf16.mxu0 0
    %124 = vmatpush1.bf16.msra.mxu0 %v96
    %125 = vmatprep.subr.bf16.mxu0 0
    %126 = vmatpush1.bf16.msra.mxu0 %v95
    %127 = vmatprep.subr.bf16.mxu0 0
    %128 = vmatpush2.bf16.msra.mxu0 0
    %129 = vmatprep.subr.bf16.mxu0 0
    %130 = vmatpush2.bf16.msra.mxu0 0
    %131 = vmatprep.subr.bf16.mxu0 0
    %132 = vmatpush2.bf16.msra.mxu0 0
    %133 = vmatprep.subr.bf16.mxu0 0
    %134 = vmatpush2.bf16.msra.mxu0 0
    %135 = vmatprep.subr.bf16.mxu0 0
    %136 = vmatpush2.bf16.msra.mxu0 0
    %137 = vmatprep.subr.bf16.mxu0 0
    %138 = vmatpush2.bf16.msra.mxu0 0
    %139 = vmatprep.subr.bf16.mxu0 0
    %140 = vmatpush2.bf16.msra.mxu0 0
    %141 = vmatprep.subr.bf16.mxu0 0
    %142 = vmatpush2.bf16.msra.mxu0 0
    %143 = vmatprep.mubr.bf16.mxu0 0
    %144 = vmatmul.mubr.bf16.gmra.mxu0 %v46
    %v145 = vpop.f32.mrf.mxu0
    %v146 = vadd.f32 0.0, %v145
    %v147 = vpop.f32.mrf.mxu0
    %v148 = vpop.f32.mrf.mxu0
    %v149 = vadd.f32 0.0, %v148
    %v150 = vpop.f32.mrf.mxu0
    %151 = vdwg.mxu0
    %v152 = vadd.f32 %v42, %v146
    %v153 = vadd.f32 %v43, %v149
    %154 = vst [vmem:[%s3] sm:$0xff] %v152
    %155 = vst [vmem:[%s3 + $0x8] sm:$0xff] %v153
    // Predicated region
    $region22: #{qlinear_forward.1} parent=1 // pred_check
      _
    $region23: #{qlinear_forward.1} parent=1 // pred_check_branch
      %157 = sbr.rel (0) target = $region25
    $region24: #{qlinear_forward.1} parent=1 // pred_region
      _
    $region25: #{qlinear_forward.1} parent=1 // pred_fallthru
      _
    // Predicated region
    $region26: #{qlinear_forward.1} parent=1 // pred_check
      _
    $region27: #{qlinear_forward.1} parent=1 // pred_check_branch
      %159 = sbr.rel (0) target = $region29
    $region28: #{qlinear_forward.1} parent=1 // pred_region
      _
    $region29: #{qlinear_forward.1} parent=1 // pred_fallthru
      _
    %160 = vsyncpa [#allocation3], 1

</llo_original>
